<compile_context>
chip_gen: v7x
topology: tpu7x:2x2x1
jax: 0.10.0
libtpu: 0.0.40
codegen_flags: <defaults>
</compile_context>

<pallas_src>
import jax
import jax.numpy as jnp
from jax.experimental import pallas as pl
from jax.experimental.pallas import tpu as pltpu

HIDDEN = 768  # AlbertFC.fc = nn.Linear(768, 1)


def _albert_fc_kernel(x_ref, w_ref, b_ref, o_ref):
    # x_ref: (tb, H) CLS-token hidden states (f32 or bf16)
    # w_ref: (1, H)  fc weight in nn.Linear layout
    # b_ref: (1,)    bias, resident in SMEM (scalar read)
    # o_ref: (1, tb) lane-dense output row
    x = jnp.maximum(x_ref[...].astype(jnp.float32), 0.0)   # ReLU (VPU), f32 acc
    w = w_ref[...].astype(jnp.float32)                      # (1, H), broadcasts
    # N=1 linear as VPU multiply + XLU lane reduce (a (tb,768)@(768,1) MXU dot
    # would light up 1 of 128/256 columns).
    y = jnp.sum(x * w, axis=-1) + b_ref[0]                   # (tb,) f32
    # Lane-dense store: all tb results on lanes of a single (1, tb) row.
    o_ref[...] = y.reshape(o_ref.shape).astype(o_ref.dtype)


def _round_up(x, m):
    return ((x + m - 1) // m) * m


def _pick_batch_tile(B, block_b):
    # Lane-aligned tiles; cap at 2048 rows so double-buffered f32 input tiles
    # stay inside v5e's 16 MiB scoped-VMEM default (2 * 2048 * 768 * 4B = 12 MiB).
    block_b = max(128, _round_up(min(block_b, 2048), 128))
    if B > block_b:
        return block_b
    if B >= 512:
        # Ensure >= 2 parallel grid steps: v7x dual-TC sharding + DMA/compute overlap.
        tb = _round_up(pl.cdiv(B, 2), 128)
        if tb < B:
            return tb
    return B


def _albert_fc_xla(sequence_output, fc_weight, fc_bias):
    cls = jnp.maximum(sequence_output[:, 0, :].astype(jnp.float32), 0.0)
    return cls @ fc_weight.astype(jnp.float32).T + fc_bias.astype(jnp.float32)


def albert_fc_forward(sequence_output, fc_weight, fc_bias, *, block_b=1024,
                      min_pallas_batch=256):
    """sequence_output: (B, S, 768) f32/bf16 encoder output; fc_weight: (1, 768)
    (nn.Linear layout); fc_bias: (1,).
    Returns (B, 1) f32 = Linear(ReLU(sequence_output[:, 0, :]))."""
    B, S, H = sequence_output.shape
    assert H == HIDDEN, "AlbertFC.fc is defined as nn.Linear(768, 1)"
    assert fc_weight.shape == (1, H) and fc_bias.shape == (1,)

    # At small batch this op is pure launch/grid-step overhead; let XLA fuse
    # the slice + ReLU + dot into the upstream encoder epilogue instead.
    if B < min_pallas_batch:
        return _albert_fc_xla(sequence_output, fc_weight, fc_bias)

    tb = _pick_batch_tile(B, block_b)
    grid = (pl.cdiv(B, tb),)

    # Free, layout-preserving reshape: row b of (B, S*H) starts with the CLS
    # token, so column-block 0 of a (tb, 768) rectangular block is exactly
    # sequence_output[:, 0, :] for that batch tile.
    seq2d = sequence_output.reshape(B, S * H)

    x_spec_kwargs = {}
    if grid[0] >= 3:
        # Strided CLS read (3 KiB contiguous per row): a third in-flight buffer
        # keeps the DMA engine busy across step boundaries.
        x_spec_kwargs["pipeline_mode"] = pl.Buffered(3)

    in_bytes = sequence_output.dtype.itemsize
    cost = pl.CostEstimate(
        flops=2 * B * HIDDEN,
        transcendentals=0,
        bytes_accessed=B * HIDDEN * in_bytes
        + HIDDEN * fc_weight.dtype.itemsize
        + B * 4,
    )

    out = pl.pallas_call(
        _albert_fc_kernel,
        out_shape=jax.ShapeDtypeStruct((1, B), jnp.float32),
        grid=grid,
        in_specs=[
            # CLS rows only: rectangular, tile-aligned (tb, 768) block.
            pl.BlockSpec((tb, HIDDEN), lambda i: (i, 0), **x_spec_kwargs),
            # Weight stays VMEM-resident (constant block index across grid).
            pl.BlockSpec((1, HIDDEN), lambda i: (0, 0)),
            # Bias as a scalar in SMEM (no padded VMEM tile / extra DMA).
            pl.BlockSpec(memory_space=pltpu.MemorySpace.SMEM),
        ],
        # Lane-dense output: (1, tb) blocks of a (1, B) result.
        out_specs=pl.BlockSpec((1, tb), lambda i: (0, i)),
        compiler_params=pltpu.CompilerParams(
            dimension_semantics=("parallel",),
        ),
        cost_estimate=cost,
    )(seq2d, fc_weight, fc_bias)

    # (1, B) -> (B, 1): flat-order-preserving reshape, free in the wrapper.
    return out.reshape(B, 1)


if __name__ == "__main__":
    key = jax.random.PRNGKey(0)
    k_seq, k_w, k_b = jax.random.split(key, 3)

    B, S, H = 8, 16, HIDDEN  # hidden is architecturally fixed at 768

    # Stand-in for pretrained_model(...)'s sequence output (outputs[0]).
    sequence_output = jax.random.normal(k_seq, (B, S, H), dtype=jnp.float32)

    # Deterministic fc parameters (nn.Linear(768, 1): weight (1, 768), bias (1,)).
    fc_weight = jax.random.normal(k_w, (1, H), dtype=jnp.float32) * 0.02
    fc_bias = jax.random.normal(k_b, (1,), dtype=jnp.float32) * 0.02

    # min_pallas_batch=0 forces the Pallas path even at this tiny demo batch.
    out = albert_fc_forward(sequence_output, fc_weight, fc_bias,
                            min_pallas_batch=0)
    out = jax.block_until_ready(out)

    # Reference check in plain JAX.
    cls_ref = jnp.maximum(sequence_output[:, 0, :], 0.0)
    ref = cls_ref @ fc_weight.T + fc_bias
    assert out.shape == (B, 1)
    assert jnp.allclose(out, ref, atol=1e-4, rtol=1e-4)

    print("KERNEL_OK")
</pallas_src>

<mosaic_0001>
module attributes {stable_mosaic.version = 11 : i64} {
  func.func @_albert_fc_kernel(%arg0: i32, %arg1: memref<8x768xf32, #tpu.memory_space<vmem>>, %arg2: memref<1x768xf32, #tpu.memory_space<vmem>>, %arg3: memref<1xf32, #tpu.memory_space<smem>>, %arg4: memref<1x8xf32, #tpu.memory_space<vmem>>) attributes {dimension_semantics = [#tpu.dimension_semantics<parallel>], iteration_bounds = array<i64: 1>, scalar_prefetch = 0 : i64, scratch_operands = 0 : i64, tpu.core_type = #tpu.core_type<tc>, window_params = [{transform_indices = @transform_0, window_bounds = array<i64: 8, 768>}, {pipeline_mode = #tpu.pipeline_mode<synchronous>, transform_indices = @transform_1, window_bounds = array<i64: 1, 768>}, {transform_indices = @transform_2, window_bounds = array<i64: 1>}, {transform_indices = @transform_3, window_bounds = array<i64: 1, 8>}]} {
    %c0 = arith.constant 0 : index
    %c0_0 = arith.constant 0 : index
    %0 = vector.load %arg1[%c0, %c0_0] : memref<8x768xf32, #tpu.memory_space<vmem>>, vector<8x768xf32>
    %cst = arith.constant 0.000000e+00 : f32
    %1 = vector.broadcast %cst : f32 to vector<8x768xf32>
    %2 = arith.maximumf %0, %1 : vector<8x768xf32>
    %c0_1 = arith.constant 0 : index
    %c0_2 = arith.constant 0 : index
    %3 = vector.load %arg2[%c0_1, %c0_2] : memref<1x768xf32, #tpu.memory_space<vmem>>, vector<1x768xf32>
    %4 = vector.broadcast %3 : vector<1x768xf32> to vector<8x768xf32>
    %5 = arith.mulf %2, %4 : vector<8x768xf32>
    %cst_3 = arith.constant dense<0.000000e+00> : vector<8xf32>
    %6 = vector.multi_reduction <add>, %5, %cst_3 [1] : vector<8x768xf32> to vector<8xf32>
    %c0_4 = arith.constant 0 : index
    %7 = memref.load %arg3[%c0_4] : memref<1xf32, #tpu.memory_space<smem>>
    %8 = vector.broadcast %7 : f32 to vector<8xf32>
    %9 = arith.addf %6, %8 : vector<8xf32>
    %10 = vector.shape_cast %9 : vector<8xf32> to vector<1x8xf32>
    %c0_5 = arith.constant 0 : index
    %c0_6 = arith.constant 0 : index
    %11 = vector.load %arg4[%c0_5, %c0_6] : memref<1x8xf32, #tpu.memory_space<vmem>>, vector<1x8xf32>
    tpu.vector_store %arg4[%c0_5, %c0_6], %10 {strides = array<i32>} : memref<1x8xf32, #tpu.memory_space<vmem>>, vector<1x8xf32>,
    return
  }
  func.func @transform_0(%arg0: i32) -> (i32, i32) {
    %c0_i32 = arith.constant 0 : i32
    %c0_i32_0 = arith.constant 0 : i32
    return %arg0, %c0_i32 : i32, i32
  }
  func.func @transform_1(%arg0: i32) -> (i32, i32) {
    %c0_i32 = arith.constant 0 : i32
    %c0_i32_0 = arith.constant 0 : i32
    %c0_i32_1 = arith.constant 0 : i32
    return %c0_i32, %c0_i32_0 : i32, i32
  }
  func.func @transform_2(%arg0: i32) -> i32 {
    %c0_i32 = arith.constant 0 : i32
    %c0_i32_0 = arith.constant 0 : i32
    return %c0_i32 : i32
  }
  func.func @transform_3(%arg0: i32) -> (i32, i32) {
    %c0_i32 = arith.constant 0 : i32
    %c0_i32_0 = arith.constant 0 : i32
    return %c0_i32, %arg0 : i32, i32
  }
}

</mosaic_0001>

<llo_original>
// kernel: tpu_custom_call.1
$region0: #{tpu_custom_call.1}
  #allocation0 [shape = 'u32[]', space=smem, size = 0x4, offset = 0x4, fixed_abs, tag = 'smem constant byte address 0x4 - core index']
  #allocation1 [shape = 'u32[144,128]{1,0:T(1,128)}', space=vmem, size = 0x12000, scoped, tag = 'internal scratch']
  #allocation2 [shape = 'f32[1]{0:T(128)S(6)}', space=smem, size = 0x200, scoped, tag = 'scoped memory for tpu_custom_call.1']
  %s0 = inlined_call_operand.hbm [shape: f32[8,12288], index: 0, kind: input, shape index: {}]
  %s1 = inlined_call_operand.vmem [shape: f32[1,768], index: 1, kind: input, shape index: {}]
  %s2 = inlined_call_operand.<no memory space> [shape: f32[1], index: 2, kind: input, shape index: {}]
  %s3 = inlined_call_operand.hbm [shape: f32[1,8], index: 3, kind: output, shape index: {}]
  %s4 = sld [smem:[#allocation0]]
  $region26: #{tpu_custom_call.1} parent=0
    _
  %s6 = ssub.s32 1, %s4
  %s7 = scalar_select 0, %s6, %s4
  %8 = sst [smem:[#allocation2]] %s2
  $region1: #{tpu_custom_call.1} parent=0
    #allocation3 [shape = 'u8[24576]{0}', space=vmem, size = 0x6000, scoped, tag = 'input window, operand 0, single buffered']
    #allocation4 [shape = 's32[1]{0}', space=sflag, size = 0x4, scoped, tag = 'scoped memory for tpu_custom_call.1']
    #allocation5 [shape = 's32[1]{0}', space=sflag, size = 0x4, scoped, tag = 'scoped memory for tpu_custom_call.1']
    #allocation6 [shape = 'u8[512]{0}', space=vmem, size = 0x400, scoped, tag = 'output window, operand 0, single buffered']
    %9 = vsyncpa [#allocation4], 0
    %10 = vsyncpa [#allocation5], 0
    // Predicated region
    $region2: #{tpu_custom_call.1} parent=1 // pred_check
      _
    $region3: #{tpu_custom_call.1} parent=1 // pred_check_branch
      %12 = sbr.rel (0) target = $region5
    $region4: #{tpu_custom_call.1} parent=1 // pred_region
      %s14 = ssub.s32 768, 768
      %15 = vsyncadd [#allocation4], %s14
      %s17 = sshll.u32 [#allocation3], 4
      %s18 = int_to_ptr.vmem [resolvable:$true] %s17
      %20 = dma.hbm_to_vmem [thread:$0]  %s0, 768, %s18, [#allocation4]
    $region5: #{tpu_custom_call.1} parent=1 // pred_fallthru
      _
    // Predicated region
    $region6: #{tpu_custom_call.1} parent=1 // pred_check
      _
    $region7: #{tpu_custom_call.1} parent=1 // pred_check_branch
      %22 = sbr.rel (0) target = $region9
    $region8: #{tpu_custom_call.1} parent=1 // pred_region
      _
    $region9: #{tpu_custom_call.1} parent=1 // pred_fallthru
      _
    // Predicated region
    $region10: #{tpu_custom_call.1} parent=1 // pred_check
      _
    $region11: #{tpu_custom_call.1} parent=1 // pred_check_branch
      %24 = sbr.rel (0) target = $region13
    $region12: #{tpu_custom_call.1} parent=1 // pred_region
      _
    $region13: #{tpu_custom_call.1} parent=1 // pred_fallthru
      _
    // Predicated region
    $region14: #{tpu_custom_call.1} parent=1 // pred_check
      _
    $region15: #{tpu_custom_call.1} parent=1 // pred_check_branch
      %26 = sbr.rel (0) target = $region17
    $region16: #{tpu_custom_call.1} parent=1 // pred_region
      %27 = dma.done [#allocation4], 768
    $region17: #{tpu_custom_call.1} parent=1 // pred_fallthru
      _
    %v28 = vld [vmem:[#allocation3] sm:$0xff]
    %v29 = vld [vmem:[#allocation3 + $0x8] sm:$0xff]
    %v30 = vld [vmem:[#allocation3 + $0x10] sm:$0xff]
    %v31 = vld [vmem:[#allocation3 + $0x18] sm:$0xff]
    %v32 = vld [vmem:[#allocation3 + $0x20] sm:$0xff]
    %v33 = vld [vmem:[#allocation3 + $0x28] sm:$0xff]
    %v34 = vmax.f32 %v28, 0.0
    %v35 = vmax.f32 %v29, 0.0
    %v36 = vmax.f32 %v30, 0.0
    %v37 = vmax.f32 %v31, 0.0
    %v38 = vmax.f32 %v32, 0.0
    %v39 = vmax.f32 %v33, 0.0
    %v40 = vld [vmem:[%s1] sm:$0x3f]
    %v42 = vlaneseq
    %v43 = vshrl.u32 %v42, 7
    %v44 = vsub.s32 0, %v43
    %v45 = vrot.slane %v40, %v44
    %v46 = vlaneseq
    %v47 = vshrl.u32 %v46, 7
    %v48 = vsub.s32 1, %v47
    %v49 = vrot.slane %v40, %v48
    %v50 = vlaneseq
    %v51 = vshrl.u32 %v50, 7
    %v52 = vsub.s32 2, %v51
    %v53 = vrot.slane %v40, %v52
    %v54 = vlaneseq
    %v55 = vshrl.u32 %v54, 7
    %v56 = vsub.s32 3, %v55
    %v57 = vrot.slane %v40, %v56
    %v58 = vlaneseq
    %v59 = vshrl.u32 %v58, 7
    %v60 = vsub.s32 4, %v59
    %v61 = vrot.slane %v40, %v60
    %v62 = vlaneseq
    %v63 = vshrl.u32 %v62, 7
    %v64 = vsub.s32 5, %v63
    %v65 = vrot.slane %v40, %v64
    %v72 = vmul.f32 %v34, %v45
    %v73 = vmul.f32 %v35, %v49
    %v74 = vmul.f32 %v36, %v53
    %v75 = vmul.f32 %v37, %v57
    %v76 = vmul.f32 %v38, %v61
    %v77 = vmul.f32 %v39, %v65
    %v78 = vadd.f32 %v72, %v73
    %v79 = vadd.f32 %v78, %v74
    %v80 = vadd.f32 %v79, %v75
    %v81 = vadd.f32 %v80, %v76
    %v82 = vadd.f32 %v81, %v77
    %83 = vadd.xlane.f32.xlu0 %v82
    %v84 = vpop.xlane.xlu0 %83
    %s85 = sld [smem:[#allocation2]]
    %v86 = vstv %s85
    %v87 = vadd.f32 %v84, %v86
    %v89 = vlaneseq
    %v90 = vand.u32 %v89, 127
    %v91 = vlaneseq
    %v92 = vshrl.u32 %v91, 7
    %v93 = vsub.s32 %v90, %v92
    %v94 = vrot.slane %v87, %v93
    %vm96 = vcmask 57344
    %97 = vst.msk [vmem:[#allocation6] sm:$0x1] %vm96, %v94
    // Predicated region
    $region18: #{tpu_custom_call.1} parent=1 // pred_check
      _
    $region19: #{tpu_custom_call.1} parent=1 // pred_check_branch
      %99 = sbr.rel (0) target = $region21
    $region20: #{tpu_custom_call.1} parent=1 // pred_region
      %s101 = ssub.s32 16, 16
      %102 = vsyncadd [#allocation5], %s101
      %s104 = sshll.u32 [#allocation6], 4
      %s105 = int_to_ptr.vmem [resolvable:$true] %s104
      %107 = dma.vmem_to_hbm [thread:$0]  %s105, 16, %s3, [#allocation5]
    $region21: #{tpu_custom_call.1} parent=1 // pred_fallthru
      _
    // Predicated region
    $region22: #{tpu_custom_call.1} parent=1 // pred_check
      _
    $region23: #{tpu_custom_call.1} parent=1 // pred_check_branch
      %109 = sbr.rel (0) target = $region25
    $region24: #{tpu_custom_call.1} parent=1 // pred_region
      %110 = dma.done [#allocation5], 16
    $region25: #{tpu_custom_call.1} parent=1 // pred_fallthru
      _
    %111 = vsyncpa [#allocation4], 1
    %112 = vsyncpa [#allocation5], 1

</llo_original>
